<compile_context>
chip_gen: v5e
topology: v5e:2x2
jax: 0.10.0
libtpu: 0.0.40
codegen_flags: <defaults>
</compile_context>

<pallas_src>
import jax
import jax.numpy as jnp
from jax.experimental import pallas as pl
from jax.experimental.pallas import tpu as pltpu


_LANES = 1024          # lane-dense width (multiple of 128) -> unmasked stores
_MAX_BLOCK_ROWS = 256  # (2, 256, 1024) f32 block = 2 MiB per array


def _modrelu_kernel(bias_ref, x_ref, o_ref):
    """x_ref / o_ref: (2, blk_rows, _LANES) f32; plane 0 = real, plane 1 = imag."""
    b = bias_ref[0]                       # scalar bias from SMEM
    re = x_ref[0]
    im = x_ref[1]

    mag2 = re * re + im * im
    # mask = (|z| + b >= 0) * (1 + b / |z|)
    #   gate: |z| + b >= 0  <=>  (b >= 0) or (|z|^2 >= b^2)   (no sqrt needed)
    #   1 + b/|z| = 1 + b * rsqrt(|z|^2)                       (EUP rsqrt, no div)
    inv_mag = jax.lax.rsqrt(mag2)
    scale = 1.0 + b * inv_mag
    gate = jnp.logical_or(b >= 0.0, mag2 >= b * b)
    mask = jnp.where(gate, scale, 0.0)

    o_ref[0] = mask * re
    o_ref[1] = mask * im


def mod_relu_pallas(x: jax.Array, bias: jax.Array) -> jax.Array:
    """modReLU of a complex64 array `x` (any shape); bias: float32 scalar/(1,)."""
    orig_shape = x.shape
    n = x.size

    # TODO(synk): lax.bitcast_convert_type does not support complex dtypes, so a
    # zero-copy interleaved view is impossible; this split is one fused HBM pass.
    re = jnp.real(x).astype(jnp.float32).reshape(-1)
    im = jnp.imag(x).astype(jnp.float32).reshape(-1)

    rows = pl.cdiv(n, _LANES)
    blk_rows = min(_MAX_BLOCK_ROWS, rows)
    rows_p = pl.cdiv(rows, blk_rows) * blk_rows
    pad = rows_p * _LANES - n
    if pad:
        re = jnp.pad(re, (0, pad))
        im = jnp.pad(im, (0, pad))

    # Single stacked slab: one input and one output DMA stream.
    xs = jnp.stack([re.reshape(rows_p, _LANES), im.reshape(rows_p, _LANES)])

    grid = (rows_p // blk_rows,)
    blk = (2, blk_rows, _LANES)

    total_f32 = 2 * rows_p * _LANES
    cost = pl.CostEstimate(
        flops=10 * total_f32 // 2,
        transcendentals=total_f32 // 2,
        bytes_accessed=2 * total_f32 * 4,
    )

    bias_arr = jnp.asarray(bias, dtype=jnp.float32).reshape(-1)[:1]

    out = pl.pallas_call(
        _modrelu_kernel,
        out_shape=jax.ShapeDtypeStruct((2, rows_p, _LANES), jnp.float32),
        grid=grid,
        in_specs=[
            pl.BlockSpec(memory_space=pltpu.SMEM),      # bias scalar (1,)
            pl.BlockSpec(blk, lambda i: (0, i, 0)),     # stacked re/im planes
        ],
        out_specs=pl.BlockSpec(blk, lambda i: (0, i, 0)),
        compiler_params=pltpu.CompilerParams(
            dimension_semantics=("parallel",)),
        cost_estimate=cost,
    )(bias_arr, xs)

    out_re = out[0].reshape(-1)[:n].reshape(orig_shape)
    out_im = out[1].reshape(-1)[:n].reshape(orig_shape)
    return jax.lax.complex(out_re, out_im)


def mod_relu_ref(x, bias):
    re = jnp.real(x)
    im = jnp.imag(x)
    mag = jnp.sqrt(re ** 2 + im ** 2)
    mask = (mag + bias >= 0).astype(jnp.float32) * (1 + bias / mag)
    return mask * re + 1j * (mask * im)


if __name__ == "__main__":
    key = jax.random.PRNGKey(0)
    k_re, k_im, k_b = jax.random.split(key, 3)

    B, C, H, W = 2, 4, 16, 16
    x_re = jax.random.normal(k_re, (B, C, H, W), dtype=jnp.float32)
    x_im = jax.random.normal(k_im, (B, C, H, W), dtype=jnp.float32)
    x = jax.lax.complex(x_re, x_im)  # complex64

    # nn.Parameter(FloatTensor([1]).uniform_(-0.01, 0.01))
    bias = jax.random.uniform(k_b, (1,), dtype=jnp.float32,
                              minval=-0.01, maxval=0.01)

    mod_relu_jit = jax.jit(mod_relu_pallas)
    out = jax.block_until_ready(mod_relu_jit(x, bias))

    ref = mod_relu_ref(x, bias)
    assert out.shape == x.shape and out.dtype == jnp.complex64
    assert jnp.allclose(jnp.real(out), jnp.real(ref), atol=1e-5, rtol=1e-5)
    assert jnp.allclose(jnp.imag(out), jnp.imag(ref), atol=1e-5, rtol=1e-5)

    print("KERNEL_OK")
</pallas_src>

<mosaic_0001>
module attributes {stable_mosaic.version = 11 : i64} {
  func.func @_modrelu_kernel(%arg0: i32, %arg1: memref<1xf32, #tpu.memory_space<smem>>, %arg2: memref<2x2x1024xf32, #tpu.memory_space<vmem>>, %arg3: memref<2x2x1024xf32, #tpu.memory_space<vmem>>) attributes {dimension_semantics = [#tpu.dimension_semantics<parallel>], iteration_bounds = array<i64: 1>, scalar_prefetch = 0 : i64, scratch_operands = 0 : i64, tpu.core_type = #tpu.core_type<tc>, window_params = [{transform_indices = @transform_0, window_bounds = array<i64: 1>}, {transform_indices = @transform_1, window_bounds = array<i64: 2, 2, 1024>}, {transform_indices = @transform_2, window_bounds = array<i64: 2, 2, 1024>}]} {
    %c0 = arith.constant 0 : index
    %0 = memref.load %arg1[%c0] : memref<1xf32, #tpu.memory_space<smem>>
    %c0_0 = arith.constant 0 : index
    %c0_1 = arith.constant 0 : index
    %c0_2 = arith.constant 0 : index
    %1 = vector.load %arg2[%c0_0, %c0_1, %c0_2] : memref<2x2x1024xf32, #tpu.memory_space<vmem>>, vector<1x2x1024xf32>
    %2 = vector.shape_cast %1 : vector<1x2x1024xf32> to vector<2x1024xf32>
    %c1 = arith.constant 1 : index
    %c0_3 = arith.constant 0 : index
    %c0_4 = arith.constant 0 : index
    %3 = vector.load %arg2[%c1, %c0_3, %c0_4] : memref<2x2x1024xf32, #tpu.memory_space<vmem>>, vector<1x2x1024xf32>
    %4 = vector.shape_cast %3 : vector<1x2x1024xf32> to vector<2x1024xf32>
    %5 = arith.mulf %2, %2 : vector<2x1024xf32>
    %6 = arith.mulf %4, %4 : vector<2x1024xf32>
    %7 = arith.addf %5, %6 : vector<2x1024xf32>
    %8 = math.rsqrt %7 : vector<2x1024xf32>
    %9 = vector.broadcast %0 : f32 to vector<2x1024xf32>
    %10 = arith.mulf %9, %8 : vector<2x1024xf32>
    %cst = arith.constant 1.000000e+00 : f32
    %11 = vector.broadcast %cst : f32 to vector<2x1024xf32>
    %12 = arith.addf %11, %10 : vector<2x1024xf32>
    %cst_5 = arith.constant 0.000000e+00 : f32
    %13 = arith.cmpf oge, %0, %cst_5 : f32
    %14 = arith.mulf %0, %0 : f32
    %15 = vector.broadcast %14 : f32 to vector<2x1024xf32>
    %16 = arith.cmpf oge, %7, %15 : vector<2x1024xf32>
    %17 = vector.broadcast %13 : i1 to vector<2x1024xi1>
    %18 = arith.ori %17, %16 : vector<2x1024xi1>
    %cst_6 = arith.constant 0.000000e+00 : f32
    %19 = vector.broadcast %cst_6 : f32 to vector<2x1024xf32>
    %20 = arith.select %18, %12, %19 : vector<2x1024xi1>, vector<2x1024xf32>
    %21 = arith.mulf %20, %2 : vector<2x1024xf32>
    %c0_7 = arith.constant 0 : index
    %c0_8 = arith.constant 0 : index
    %c0_9 = arith.constant 0 : index
    %22 = vector.load %arg3[%c0_7, %c0_8, %c0_9] : memref<2x2x1024xf32, #tpu.memory_space<vmem>>, vector<1x2x1024xf32>
    %23 = vector.shape_cast %22 : vector<1x2x1024xf32> to vector<2x1024xf32>
    %24 = vector.shape_cast %21 : vector<2x1024xf32> to vector<1x2x1024xf32>
    tpu.vector_store %arg3[%c0_7, %c0_8, %c0_9], %24 {strides = array<i32>} : memref<2x2x1024xf32, #tpu.memory_space<vmem>>, vector<1x2x1024xf32>,
    %25 = arith.mulf %20, %4 : vector<2x1024xf32>
    %c1_10 = arith.constant 1 : index
    %c0_11 = arith.constant 0 : index
    %c0_12 = arith.constant 0 : index
    %26 = vector.load %arg3[%c1_10, %c0_11, %c0_12] : memref<2x2x1024xf32, #tpu.memory_space<vmem>>, vector<1x2x1024xf32>
    %27 = vector.shape_cast %26 : vector<1x2x1024xf32> to vector<2x1024xf32>
    %28 = vector.shape_cast %25 : vector<2x1024xf32> to vector<1x2x1024xf32>
    tpu.vector_store %arg3[%c1_10, %c0_11, %c0_12], %28 {strides = array<i32>} : memref<2x2x1024xf32, #tpu.memory_space<vmem>>, vector<1x2x1024xf32>,
    return
  }
  func.func @transform_0(%arg0: i32) -> i32 {
    %c0_i32 = arith.constant 0 : i32
    %c0_i32_0 = arith.constant 0 : i32
    return %c0_i32 : i32
  }
  func.func @transform_1(%arg0: i32) -> (i32, i32, i32) {
    %c0_i32 = arith.constant 0 : i32
    %c0_i32_0 = arith.constant 0 : i32
    %c0_i32_1 = arith.constant 0 : i32
    return %c0_i32, %arg0, %c0_i32_0 : i32, i32, i32
  }
  func.func @transform_2(%arg0: i32) -> (i32, i32, i32) {
    %c0_i32 = arith.constant 0 : i32
    %c0_i32_0 = arith.constant 0 : i32
    %c0_i32_1 = arith.constant 0 : i32
    return %c0_i32, %arg0, %c0_i32_0 : i32, i32, i32
  }
}

</mosaic_0001>

<llo_original>
// kernel: custom-call.1
$region0: #{custom-call.1}
  %s0 = inlined_call_operand.hbm [shape: c64[2,4,16,16], index: 0, kind: input, shape index: {}]
  %s1 = inlined_call_operand.vmem [shape: f32[2,4,16,16], index: 1, kind: output, shape index: {}]
  %s2 = scalar_lea.hbm %s0, 128
  $region1: #{custom-call.1} parent=0
    #allocation0 [shape = 's32[1]{0}', space=sflag, size = 0x4, scoped, tag = 'scoped memory for custom-call.1']
    %3 = vsyncpa [#allocation0], 0
    %s5 = sshll.u32 %s2, 4
    %s6 = int_to_ptr.hbm [resolvable:$true] %s5
    %s7 = sshll.u32 %s1, 4
    %s8 = int_to_ptr.vmem [resolvable:$true] %s7
    %10 = dma.hbm_to_vmem [thread:$0]  %s6, 2048, %s8, [#allocation0]
    %12 = dma.done [#allocation0], 2048
    %13 = vsyncpa [#allocation0], 1

// kernel: custom-call
$region0: #{custom-call}
  %s0 = inlined_call_operand.hbm [shape: c64[2,4,16,16], index: 0, kind: input, shape index: {}]
  %s1 = inlined_call_operand.vmem [shape: f32[2,4,16,16], index: 1, kind: output, shape index: {}]
  $region1: #{custom-call} parent=0
    #allocation0 [shape = 's32[1]{0}', space=sflag, size = 0x4, scoped, tag = 'scoped memory for custom-call']
    %2 = vsyncpa [#allocation0], 0
    %s4 = sshll.u32 %s0, 4
    %s5 = int_to_ptr.hbm [resolvable:$true] %s4
    %s6 = sshll.u32 %s1, 4
    %s7 = int_to_ptr.vmem [resolvable:$true] %s6
    %9 = dma.hbm_to_vmem [thread:$0]  %s5, 2048, %s7, [#allocation0]
    %11 = dma.done [#allocation0], 2048
    %12 = vsyncpa [#allocation0], 1

// kernel: squeeze.3
$region0: #{squeeze.3}
  %s0 = inlined_call_operand.vmem [shape: f32[1,2,1024], index: 0, kind: input, shape index: {}]
  %s1 = inlined_call_operand.vmem [shape: f32[2,4,16,16], index: 1, kind: output, shape index: {}]
  $region1: #{squeeze.3} parent=0
    #allocation0 [shape = 'u8[32768]{0}', space=vmem, size = 0x8000, scoped, tag = 'scoped mem for input reshape']
    %s3 = ssub.s32 4, 1
    %s4 = scalar_lea.vmem %s0, 14
    %v5 = vld [vmem:[%s4] sm:%s3]
    %s6 = scalar_lea.vmem [#allocation0], 56
    %7 = vst [vmem:[%s6] sm:%s3] %v5
    %s8 = scalar_lea.vmem %s0, 12
    %v9 = vld [vmem:[%s8] sm:%s3]
    %s10 = scalar_lea.vmem [#allocation0], 48
    %11 = vst [vmem:[%s10] sm:%s3] %v9
    %s12 = scalar_lea.vmem %s0, 10
    %v13 = vld [vmem:[%s12] sm:%s3]
    %s14 = scalar_lea.vmem [#allocation0], 40
    %15 = vst [vmem:[%s14] sm:%s3] %v13
    %s16 = scalar_lea.vmem %s0, 8
    %v17 = vld [vmem:[%s16] sm:%s3]
    %s18 = scalar_lea.vmem [#allocation0], 32
    %19 = vst [vmem:[%s18] sm:%s3] %v17
    %s20 = scalar_lea.vmem %s0, 6
    %v21 = vld [vmem:[%s20] sm:%s3]
    %s22 = scalar_lea.vmem [#allocation0], 24
    %23 = vst [vmem:[%s22] sm:%s3] %v21
    %s24 = scalar_lea.vmem %s0, 4
    %v25 = vld [vmem:[%s24] sm:%s3]
    %s26 = scalar_lea.vmem [#allocation0], 16
    %27 = vst [vmem:[%s26] sm:%s3] %v25
    %s28 = scalar_lea.vmem %s0, 2
    %v29 = vld [vmem:[%s28] sm:%s3]
    %s30 = scalar_lea.vmem [#allocation0], 8
    %31 = vst [vmem:[%s30] sm:%s3] %v29
    %v32 = vld [vmem:[%s0] sm:%s3]
    %33 = vst [vmem:[#allocation0] sm:%s3] %v32
    %v34 = vld [vmem:[#allocation0] sm:$0x3]
    %vm35 = vcmask 130048
    %36 = vst.msk [vmem:[%s1] sm:$0x1] %vm35, %v34
    %s37 = scalar_lea.vmem %s1, 63
    %38 = vst.msk [vmem:[%s37] sm:$0x2] %vm35, %v34
    %s39 = scalar_lea.vmem [#allocation0], 8
    %v40 = vld [vmem:[%s39] sm:$0x3]
    %vm41 = vcmask 130048
    %s42 = scalar_lea.vmem %s1, 8
    %43 = vst.msk [vmem:[%s42] sm:$0x1] %vm41, %v40
    %s44 = scalar_lea.vmem %s1, 71
    %45 = vst.msk [vmem:[%s44] sm:$0x2] %vm41, %v40
    %s46 = scalar_lea.vmem [#allocation0], 16
    %v47 = vld [vmem:[%s46] sm:$0x3]
    %vm48 = vcmask 130048
    %s49 = scalar_lea.vmem %s1, 16
    %50 = vst.msk [vmem:[%s49] sm:$0x1] %vm48, %v47
    %s51 = scalar_lea.vmem %s1, 79
    %52 = vst.msk [vmem:[%s51] sm:$0x2] %vm48, %v47
    %s53 = scalar_lea.vmem [#allocation0], 24
    %v54 = vld [vmem:[%s53] sm:$0x3]
    %vm55 = vcmask 130048
    %s56 = scalar_lea.vmem %s1, 24
    %57 = vst.msk [vmem:[%s56] sm:$0x1] %vm55, %v54
    %s58 = scalar_lea.vmem %s1, 87
    %59 = vst.msk [vmem:[%s58] sm:$0x2] %vm55, %v54
    %s60 = scalar_lea.vmem [#allocation0], 32
    %v61 = vld [vmem:[%s60] sm:$0x3]
    %vm62 = vcmask 130048
    %s63 = scalar_lea.vmem %s1, 32
    %64 = vst.msk [vmem:[%s63] sm:$0x1] %vm62, %v61
    %s65 = scalar_lea.vmem %s1, 95
    %66 = vst.msk [vmem:[%s65] sm:$0x2] %vm62, %v61
    %s67 = scalar_lea.vmem [#allocation0], 40
    %v68 = vld [vmem:[%s67] sm:$0x3]
    %vm69 = vcmask 130048
    %s70 = scalar_lea.vmem %s1, 40
    %71 = vst.msk [vmem:[%s70] sm:$0x1] %vm69, %v68
    %s72 = scalar_lea.vmem %s1, 103
    %73 = vst.msk [vmem:[%s72] sm:$0x2] %vm69, %v68
    %s74 = scalar_lea.vmem [#allocation0], 48
    %v75 = vld [vmem:[%s74] sm:$0x3]
    %vm76 = vcmask 130048
    %s77 = scalar_lea.vmem %s1, 48
    %78 = vst.msk [vmem:[%s77] sm:$0x1] %vm76, %v75
    %s79 = scalar_lea.vmem %s1, 111
    %80 = vst.msk [vmem:[%s79] sm:$0x2] %vm76, %v75
    %s81 = scalar_lea.vmem [#allocation0], 56
    %v82 = vld [vmem:[%s81] sm:$0x3]
    %vm83 = vcmask 130048
    %s84 = scalar_lea.vmem %s1, 56
    %85 = vst.msk [vmem:[%s84] sm:$0x1] %vm83, %v82
    %s86 = scalar_lea.vmem %s1, 119
    %87 = vst.msk [vmem:[%s86] sm:$0x2] %vm83, %v82
    %v88 = vld [vmem:[#allocation0] ss:$8 sm:$0xf]
    %s89 = scalar_lea.vmem [#allocation0], 4294967265
    %v90 = vld [vmem:[%s89] ss:$8 sm:$0xf0]
    %vm91 = vcmask 1047556
    %v92 = vsel %vm91, %v90, %v88
    %93 = vrot.lane.b32.xlu0 %v92, 112
    %v94 = vpop.permute.xlu0 %93
    %vm95 = vcmask 130048
    %s96 = scalar_lea.vmem %s1, 1
    %97 = vst.msk [vmem:[%s96] ss:$8 sm:$0xf] %vm95, %v94
    %s98 = scalar_lea.vmem %s1, 33
    %99 = vst.msk [vmem:[%s98] ss:$8 sm:$0xf0] %vm95, %v94
    %s100 = scalar_lea.vmem [#allocation0], 32
    %v101 = vld [vmem:[%s100] ss:$8 sm:$0xf]
    %s102 = scalar_lea.vmem [#allocation0], 1
    %v103 = vld [vmem:[%s102] ss:$8 sm:$0xf0]
    %vm104 = vcmask 1047556
    %v105 = vsel %vm104, %v103, %v101
    %106 = vrot.lane.b32.xlu0 %v105, 112
    %v107 = vpop.permute.xlu0 %106
    %vm108 = vcmask 130048
    %s109 = scalar_lea.vmem %s1, 33
    %110 = vst.msk [vmem:[%s109] ss:$8 sm:$0xf] %vm108, %v107
    %s111 = scalar_lea.vmem %s1, 65
    %112 = vst.msk [vmem:[%s111] ss:$8 sm:$0xf0] %vm108, %v107
    %v113 = vld [vmem:[#allocation0] ss:$8 sm:$0xf]
    %s114 = scalar_lea.vmem [#allocation0], 4294967265
    %v115 = vld [vmem:[%s114] ss:$8 sm:$0xf0]
    %vm116 = vcmask 1047556
    %v117 = vsel %vm116, %v115, %v113
    %118 = vrot.lane.b32.xlu0 %v117, 96
    %v119 = vpop.permute.xlu0 %118
    %vm120 = vcmask 130048
    %s121 = scalar_lea.vmem %s1, 2
    %122 = vst.msk [vmem:[%s121] ss:$8 sm:$0xf] %vm120, %v119
    %s123 = scalar_lea.vmem %s1, 34
    %124 = vst.msk [vmem:[%s123] ss:$8 sm:$0xf0] %vm120, %v119
    %s125 = scalar_lea.vmem [#allocation0], 32
    %v126 = vld [vmem:[%s125] ss:$8 sm:$0xf]
    %s127 = scalar_lea.vmem [#allocation0], 1
    %v128 = vld [vmem:[%s127] ss:$8 sm:$0xf0]
    %vm129 = vcmask 1047556
    %v130 = vsel %vm129, %v128, %v126
    %131 = vrot.lane.b32.xlu0 %v130, 96
    %v132 = vpop.permute.xlu0 %131
    %vm133 = vcmask 130048
    %s134 = scalar_lea.vmem %s1, 34
    %135 = vst.msk [vmem:[%s134] ss:$8 sm:$0xf] %vm133, %v132
    %s136 = scalar_lea.vmem %s1, 66
    %137 = vst.msk [vmem:[%s136] ss:$8 sm:$0xf0] %vm133, %v132
    %v138 = vld [vmem:[#allocation0] ss:$8 sm:$0xf]
    %s139 = scalar_lea.vmem [#allocation0], 4294967265
    %v140 = vld [vmem:[%s139] ss:$8 sm:$0xf0]
    %vm141 = vcmask 1047556
    %v142 = vsel %vm141, %v140, %v138
    %143 = vrot.lane.b32.xlu0 %v142, 80
    %v144 = vpop.permute.xlu0 %143
    %vm145 = vcmask 130048
    %s146 = scalar_lea.vmem %s1, 3
    %147 = vst.msk [vmem:[%s146] ss:$8 sm:$0xf] %vm145, %v144
    %s148 = scalar_lea.vmem %s1, 35
    %149 = vst.msk [vmem:[%s148] ss:$8 sm:$0xf0] %vm145, %v144
    %s150 = scalar_lea.vmem [#allocation0], 32
    %v151 = vld [vmem:[%s150] ss:$8 sm:$0xf]
    %s152 = scalar_lea.vmem [#allocation0], 1
    %v153 = vld [vmem:[%s152] ss:$8 sm:$0xf0]
    %vm154 = vcmask 1047556
    %v155 = vsel %vm154, %v153, %v151
    %156 = vrot.lane.b32.xlu0 %v155, 80
    %v157 = vpop.permute.xlu0 %156
    %vm158 = vcmask 130048
    %s159 = scalar_lea.vmem %s1, 35
    %160 = vst.msk [vmem:[%s159] ss:$8 sm:$0xf] %vm158, %v157
    %s161 = scalar_lea.vmem %s1, 67
    %162 = vst.msk [vmem:[%s161] ss:$8 sm:$0xf0] %vm158, %v157
    %v163 = vld [vmem:[#allocation0] ss:$8 sm:$0xf]
    %s164 = scalar_lea.vmem [#allocation0], 4294967265
    %v165 = vld [vmem:[%s164] ss:$8 sm:$0xf0]
    %vm166 = vcmask 1047556
    %v167 = vsel %vm166, %v165, %v163
    %168 = vrot.lane.b32.xlu0 %v167, 64
    %v169 = vpop.permute.xlu0 %168
    %vm170 = vcmask 130048
    %s171 = scalar_lea.vmem %s1, 4
    %172 = vst.msk [vmem:[%s171] ss:$8 sm:$0xf] %vm170, %v169
    %s173 = scalar_lea.vmem %s1, 36
    %174 = vst.msk [vmem:[%s173] ss:$8 sm:$0xf0] %vm170, %v169
    %s175 = scalar_lea.vmem [#allocation0], 32
    %v176 = vld [vmem:[%s175] ss:$8 sm:$0xf]
    %s177 = scalar_lea.vmem [#allocation0], 1
    %v178 = vld [vmem:[%s177] ss:$8 sm:$0xf0]
    %vm179 = vcmask 1047556
    %v180 = vsel %vm179, %v178, %v176
    %181 = vrot.lane.b32.xlu0 %v180, 64
    %v182 = vpop.permute.xlu0 %181
    %vm183 = vcmask 130048
    %s184 = scalar_lea.vmem %s1, 36
    %185 = vst.msk [vmem:[%s184] ss:$8 sm:$0xf] %vm183, %v182
    %s186 = scalar_lea.vmem %s1, 68
    %187 = vst.msk [vmem:[%s186] ss:$8 sm:$0xf0] %vm183, %v182
    %v188 = vld [vmem:[#allocation0] ss:$8 sm:$0xf]
    %s189 = scalar_lea.vmem [#allocation0], 4294967265
    %v190 = vld [vmem:[%s189] ss:$8 sm:$0xf0]
    %vm191 = vcmask 1047556
    %v192 = vsel %vm191, %v190, %v188
    %193 = vrot.lane.b32.xlu0 %v192, 48
    %v194 = vpop.permute.xlu0 %193
    %vm195 = vcmask 130048
    %s196 = scalar_lea.vmem %s1, 5
    %197 = vst.msk [vmem:[%s196] ss:$8 sm:$0xf] %vm195, %v194
    %s198 = scalar_lea.vmem %s1, 37
    %199 = vst.msk [vmem:[%s198] ss:$8 sm:$0xf0] %vm195, %v194
    %s200 = scalar_lea.vmem [#allocation0], 32
    %v201 = vld [vmem:[%s200] ss:$8 sm:$0xf]
    %s202 = scalar_lea.vmem [#allocation0], 1
    %v203 = vld [vmem:[%s202] ss:$8 sm:$0xf0]
    %vm204 = vcmask 1047556
    %v205 = vsel %vm204, %v203, %v201
    %206 = vrot.lane.b32.xlu0 %v205, 48
    %v207 = vpop.permute.xlu0 %206
    %vm208 = vcmask 130048
    %s209 = scalar_lea.vmem %s1, 37
    %210 = vst.msk [vmem:[%s209] ss:$8 sm:$0xf] %vm208, %v207
    %s211 = scalar_lea.vmem %s1, 69
    %212 = vst.msk [vmem:[%s211] ss:$8 sm:$0xf0] %vm208, %v207
    %v213 = vld [vmem:[#allocation0] ss:$8 sm:$0xf]
    %s214 = scalar_lea.vmem [#allocation0], 4294967265
    %v215 = vld [vmem:[%s214] ss:$8 sm:$0xf0]
    %vm216 = vcmask 1047556
    %v217 = vsel %vm216, %v215, %v213
    %218 = vrot.lane.b32.xlu0 %v217, 32
    %v219 = vpop.permute.xlu0 %218
    %vm220 = vcmask 130048
    %s221 = scalar_lea.vmem %s1, 6
    %222 = vst.msk [vmem:[%s221] ss:$8 sm:$0xf] %vm220, %v219
    %s223 = scalar_lea.vmem %s1, 38
    %224 = vst.msk [vmem:[%s223] ss:$8 sm:$0xf0] %vm220, %v219
    %s225 = scalar_lea.vmem [#allocation0], 32
    %v226 = vld [vmem:[%s225] ss:$8 sm:$0xf]
    %s227 = scalar_lea.vmem [#allocation0], 1
    %v228 = vld [vmem:[%s227] ss:$8 sm:$0xf0]
    %vm229 = vcmask 1047556
    %v230 = vsel %vm229, %v228, %v226
    %231 = vrot.lane.b32.xlu0 %v230, 32
    %v232 = vpop.permute.xlu0 %231
    %vm233 = vcmask 130048
    %s234 = scalar_lea.vmem %s1, 38
    %235 = vst.msk [vmem:[%s234] ss:$8 sm:$0xf] %vm233, %v232
    %s236 = scalar_lea.vmem %s1, 70
    %237 = vst.msk [vmem:[%s236] ss:$8 sm:$0xf0] %vm233, %v232
    %v238 = vld [vmem:[#allocation0] ss:$8 sm:$0xf]
    %s239 = scalar_lea.vmem [#allocation0], 4294967265
    %v240 = vld [vmem:[%s239] ss:$8 sm:$0xf0]
    %vm241 = vcmask 1047556
    %v242 = vsel %vm241, %v240, %v238
    %243 = vrot.lane.b32.xlu0 %v242, 16
    %v244 = vpop.permute.xlu0 %243
    %vm245 = vcmask 130048
    %s246 = scalar_lea.vmem %s1, 7
    %247 = vst.msk [vmem:[%s246] ss:$8 sm:$0xf] %vm245, %v244
    %s248 = scalar_lea.vmem %s1, 39
    %249 = vst.msk [vmem:[%s248] ss:$8 sm:$0xf0] %vm245, %v244
    %s250 = scalar_lea.vmem [#allocation0], 32
    %v251 = vld [vmem:[%s250] ss:$8 sm:$0xf]
    %s252 = scalar_lea.vmem [#allocation0], 1
    %v253 = vld [vmem:[%s252] ss:$8 sm:$0xf0]
    %vm254 = vcmask 1047556
    %v255 = vsel %vm254, %v253, %v251
    %256 = vrot.lane.b32.xlu0 %v255, 16
    %v257 = vpop.permute.xlu0 %256
    %vm258 = vcmask 130048
    %s259 = scalar_lea.vmem %s1, 39
    %260 = vst.msk [vmem:[%s259] ss:$8 sm:$0xf] %vm258, %v257
    %s261 = scalar_lea.vmem %s1, 71
    %262 = vst.msk [vmem:[%s261] ss:$8 sm:$0xf0] %vm258, %v257

// kernel: custom-call.2
$region0: #{custom-call.2}
  %s0 = inlined_call_operand.vmem [shape: f32[2,4,16,16], index: 0, kind: input, shape index: {}]
  %s1 = inlined_call_operand.vmem [shape: f32[2,4,16,16], index: 1, kind: input, shape index: {}]
  %s2 = inlined_call_operand.hbm [shape: c64[2,4,16,16], index: 2, kind: output, shape index: {}]
  %s3 = scalar_lea.hbm %s2, 128
  $region1: #{custom-call.2} parent=0
    #allocation0 [shape = 's32[1]{0}', space=sflag, size = 0x4, scoped, tag = 'scoped memory for custom-call.2']
    %4 = vsyncpa [#allocation0], 0
    %s6 = sshll.u32 %s0, 4
    %s7 = int_to_ptr.vmem [resolvable:$true] %s6
    %s8 = sshll.u32 %s2, 4
    %s9 = int_to_ptr.hbm [resolvable:$true] %s8
    %11 = dma.vmem_to_hbm [thread:$0]  %s7, 2048, %s9, [#allocation0]
    %13 = dma.done [#allocation0], 2048
    %14 = vsyncpa [#allocation0], 1
  $region2: #{custom-call.2} parent=0
    #allocation1 [shape = 's32[1]{0}', space=sflag, size = 0x4, scoped, tag = 'scoped memory for custom-call.2']
    %15 = vsyncpa [#allocation1], 0
    %s17 = sshll.u32 %s1, 4
    %s18 = int_to_ptr.vmem [resolvable:$true] %s17
    %s19 = sshll.u32 %s3, 4
    %s20 = int_to_ptr.hbm [resolvable:$true] %s19
    %22 = dma.vmem_to_hbm [thread:$0]  %s18, 2048, %s20, [#allocation1]
    %24 = dma.done [#allocation1], 2048
    %25 = vsyncpa [#allocation1], 1

// kernel: mod_relu_pallas.1
$region0: #{mod_relu_pallas.1}
  #allocation0 [shape = 'u32[]', space=smem, size = 0x4, offset = 0x4, fixed_abs, tag = 'smem constant byte address 0x4 - core index']
  #allocation1 [shape = 'u32[72,128]{1,0:T(1,128)}', space=vmem, size = 0x9000, scoped, tag = 'internal scratch']
  #allocation2 [shape = 'f32[1]{0:T(128)S(6)}', space=smem, size = 0x200, scoped, tag = 'scoped memory for mod_relu_pallas.1']
  %s0 = inlined_call_operand.<no memory space> [shape: f32[1], index: 0, kind: input, shape index: {}]
  %s1 = inlined_call_operand.vmem [shape: f32[2,2,1024], index: 1, kind: input, shape index: {}]
  %s2 = inlined_call_operand.vmem [shape: f32[2,2,1024], index: 2, kind: output, shape index: {}]
  %s3 = sld [smem:[#allocation0]]
  $region18: #{mod_relu_pallas.1} parent=0
    _
  %s5 = ssub.s32 1, %s3
  %s6 = scalar_select 0, %s5, %s3
  %7 = sst [smem:[#allocation2]] %s0
  // Predicated region
  $region2: #{mod_relu_pallas.1} parent=0 // pred_check
    _
  $region3: #{mod_relu_pallas.1} parent=0 // pred_check_branch
    %9 = sbr.rel (0) target = $region5
  $region4: #{mod_relu_pallas.1} parent=0 // pred_region
    _
  $region5: #{mod_relu_pallas.1} parent=0 // pred_fallthru
    _
  // Predicated region
  $region6: #{mod_relu_pallas.1} parent=0 // pred_check
    _
  $region7: #{mod_relu_pallas.1} parent=0 // pred_check_branch
    %11 = sbr.rel (0) target = $region9
  $region8: #{mod_relu_pallas.1} parent=0 // pred_region
    _
  $region9: #{mod_relu_pallas.1} parent=0 // pred_fallthru
    _
  %s12 = sld [smem:[#allocation2]]
  %v13 = vld [vmem:[%s1] sm:$0xff]
  %v14 = vld [vmem:[%s1 + $0x8] sm:$0xff]
  %s15 = scalar_lea.vmem %s1, 16
  %v16 = vld [vmem:[%s15] sm:$0xff]
  %v17 = vld [vmem:[%s15 + $0x8] sm:$0xff]
  %v18 = vmul.f32 %v13, %v13
  %v19 = vmul.f32 %v14, %v14
  %v20 = vmul.f32 %v16, %v16
  %v21 = vmul.f32 %v17, %v17
  %v22 = vadd.f32 %v18, %v20
  %v23 = vadd.f32 %v19, %v21
  %v24 = vrsqrt.pop %v22
  %v25 = vmul.f32 %v24, %v22
  %v26 = vmul.f32 %v25, %v24
  %v27 = vmul.f32 0.5, %v26
  %v28 = vsub.f32 1.5, %v27
  %v29 = vmul.f32 %v24, %v28
  %vm30 = vweird.f32 %v22
  %vm31 = vweird.f32 %v24
  %vm32 = vmor %vm30, %vm31
  %v33 = vsel %vm32, %v24, %v29
  %v34 = vrsqrt.pop %v23
  %v35 = vmul.f32 %v34, %v23
  %v36 = vmul.f32 %v35, %v34
  %v37 = vmul.f32 0.5, %v36
  %v38 = vsub.f32 1.5, %v37
  %v39 = vmul.f32 %v34, %v38
  %vm40 = vweird.f32 %v23
  %vm41 = vweird.f32 %v34
  %vm42 = vmor %vm40, %vm41
  %v43 = vsel %vm42, %v34, %v39
  %v44 = vstv %s12
  %v45 = vmul.f32 %v44, %v33
  %v46 = vmul.f32 %v44, %v43
  %v47 = vadd.f32 %v45, 1.0
  %v48 = vadd.f32 %v46, 1.0
  %p49 = scmp.ge.f32.partialorder %s12, 0.0
  %s50 = smul.f32 %s12, %s12
  %v51 = vstv %s50
  %vm52 = vcmp.ge.f32.partialorder %v22, %v51
  %vm53 = vcmp.ge.f32.partialorder %v23, %v51
  %s54 = scalar_select %p49, 1, 0
  %v55 = vstv %s54
  %vm56 = vcmp.eq.s32.totalorder %v55, 1
  %vm57 = vmor %vm56, %vm52
  %vm58 = vmor %vm56, %vm53
  %v59 = vsel %vm57, %v47, 0.0
  %v60 = vsel %vm58, %v48, 0.0
  %v61 = vmul.f32 %v59, %v13
  %v62 = vmul.f32 %v60, %v14
  %63 = vst [vmem:[%s2] sm:$0xff] %v61
  %64 = vst [vmem:[%s2 + $0x8] sm:$0xff] %v62
  %v65 = vmul.f32 %v59, %v16
  %v66 = vmul.f32 %v60, %v17
  %s67 = scalar_lea.vmem %s2, 16
  %68 = vst [vmem:[%s67] sm:$0xff] %v65
  %69 = vst [vmem:[%s67 + $0x8] sm:$0xff] %v66
  // Predicated region
  $region10: #{mod_relu_pallas.1} parent=0 // pred_check
    _
  $region11: #{mod_relu_pallas.1} parent=0 // pred_check_branch
    %71 = sbr.rel (0) target = $region13
  $region12: #{mod_relu_pallas.1} parent=0 // pred_region
    _
  $region13: #{mod_relu_pallas.1} parent=0 // pred_fallthru
    _
  // Predicated region
  $region14: #{mod_relu_pallas.1} parent=0 // pred_check
    _
  $region15: #{mod_relu_pallas.1} parent=0 // pred_check_branch
    %73 = sbr.rel (0) target = $region17
  $region16: #{mod_relu_pallas.1} parent=0 // pred_region
    _
  $region17: #{mod_relu_pallas.1} parent=0 // pred_fallthru
    _

</llo_original>
